<compile_context>
chip_gen: v7x
topology: tpu7x:2x2x1
jax: 0.10.0
libtpu: 0.0.40
codegen_flags: <defaults>
</compile_context>

<pallas_src>
import math
import jax
import jax.numpy as jnp
from jax import lax
from jax.experimental import pallas as pl
from jax.experimental.pallas import tpu as pltpu


def attention_kernel(lengths_ref, q_ref, m_ref, wq_t_ref, wkv_ref, wo_t_ref, o_ref):
    # One grid step per batch element; leading batch dim is squeezed, so all
    # refs are 2-D tiles fully resident in VMEM.
    b = pl.program_id(0)
    length = lengths_ref[b]                       # scalar, prefetched into SMEM

    d_model = wq_t_ref.shape[0]
    scale = 1.0 / math.sqrt(d_model)

    q = q_ref[...]                                # (C, Lq)  natural NCHW layout
    m = m_ref[...]                                # (S, K)

    # Projections (MXU, all standard-orientation matmuls):
    q_t = jnp.dot(wq_t_ref[...], q, preferred_element_type=jnp.float32)   # (D, Lq)
    kv = jnp.dot(m, wkv_ref[...], preferred_element_type=jnp.float32)     # (S, 2D)
    k = kv[:, :d_model]                           # (S, D)
    v = kv[:, d_model:]                           # (S, D)

    # scores^T = K @ Q^T -> (S, Lq); contraction is MXU-native, no transpose.
    scores_t = jnp.dot(k, q_t, preferred_element_type=jnp.float32) * scale

    # Key padding mask: key index (rows) >= length gets a large negative bias.
    key_idx = lax.broadcasted_iota(jnp.int32, scores_t.shape, 0)
    scores_t = jnp.where(key_idx >= length, jnp.finfo(jnp.float32).min, scores_t)

    # Softmax over keys (axis 0 in the transposed layout).
    scores_t = scores_t - jnp.max(scores_t, axis=0, keepdims=True)
    p_t = jnp.exp(scores_t)
    # approx=True -> EUP vrcp slot (VALU stays free); ~1e-3 rel error is fine.
    p_t = p_t * pl.reciprocal(jnp.sum(p_t, axis=0, keepdims=True), approx=True)

    # ctx^T = V^T @ P^T -> (D, Lq).  The single operand flip of this dataflow,
    # done explicitly on the tiny (S, D) tile so the matmul stays standard.
    ctx_t = jnp.dot(v.T, p_t, preferred_element_type=jnp.float32)          # (D, Lq)

    # out^T = Wo^T @ ctx^T -> (D, Lq): already the (d_model, H*W) output layout.
    out_t = jnp.dot(wo_t_ref[...], ctx_t, preferred_element_type=jnp.float32)
    o_ref[...] = out_t.astype(o_ref.dtype)


def source_target_attention(query_img, memory, lengths, params, d_model):
    """query_img: (B, C, H, W) f32, memory: (B, S, K) f32, lengths: (B,) int32."""
    B, C, H, W = query_img.shape
    S, K = memory.shape[1], memory.shape[2]
    Lq = H * W

    # Free reshape only (no transpose): NCHW -> (B, C, H*W).
    q_nat = query_img.reshape(B, C, Lq)

    # One-time weight re-layouts (in a real model these would be stored
    # pre-transposed / pre-fused; negligible vs. the activation path).
    wq_t = params["wq"].T                                        # (D, C)
    wkv = jnp.concatenate([params["wk"], params["wv"]], axis=1)  # (K, 2D)
    wo_t = params["wo"].T                                        # (D, D)

    out_t = pl.pallas_call(
        attention_kernel,
        out_shape=jax.ShapeDtypeStruct((B, d_model, Lq), jnp.float32),
        grid_spec=pltpu.PrefetchScalarGridSpec(
            num_scalar_prefetch=1,
            grid=(B,),
            in_specs=[
                pl.BlockSpec((None, C, Lq), lambda b, lens: (b, 0, 0)),
                pl.BlockSpec((None, S, K), lambda b, lens: (b, 0, 0)),
                pl.BlockSpec((d_model, C), lambda b, lens: (0, 0)),
                pl.BlockSpec((K, 2 * d_model), lambda b, lens: (0, 0)),
                pl.BlockSpec((d_model, d_model), lambda b, lens: (0, 0)),
            ],
            out_specs=pl.BlockSpec((None, d_model, Lq), lambda b, lens: (b, 0, 0)),
        ),
        compiler_params=pltpu.CompilerParams(
            dimension_semantics=("parallel",),   # batches independent -> v7x 2 TCs
        ),
    )(lengths, q_nat, memory, wq_t, wkv, wo_t)

    # Free reshape only: (B, D, H*W) -> (B, D, H, W).
    return out_t.reshape(B, d_model, H, W)


def reference(query_img, memory, lengths, params, d_model):
    B, C, H, W = query_img.shape
    q = jnp.transpose(query_img.reshape(B, C, H * W), (0, 2, 1))
    Q = q @ params["wq"]
    K = memory @ params["wk"]
    V = memory @ params["wv"]
    scores = jnp.einsum("bld,bsd->bls", Q, K) / math.sqrt(d_model)
    key_idx = jnp.arange(memory.shape[1])[None, None, :]
    mask = key_idx >= lengths[:, None, None]
    scores = jnp.where(mask, jnp.finfo(jnp.float32).min, scores)
    p = jax.nn.softmax(scores, axis=-1)
    out = jnp.einsum("bls,bsd->bld", p, V) @ params["wo"]
    return jnp.transpose(out, (0, 2, 1)).reshape(B, d_model, H, W)


if __name__ == "__main__":
    # Small shapes consistent with the module's forward.
    B, C, H, W = 2, 4, 4, 4          # query: NCHW, query_dim = C
    S, Kdim = 8, 8                   # memory: (B, S, key_dim)
    D_MODEL = 32
    key = jax.random.PRNGKey(0)
    k1, k2, k3, k4, k5, k6 = jax.random.split(key, 6)

    query_img = jax.random.normal(k1, (B, C, H, W), dtype=jnp.float32)
    memory = jax.random.normal(k2, (B, S, Kdim), dtype=jnp.float32)
    lengths = jnp.array([5, 8], dtype=jnp.int32)

    # Deterministic parameter init (bias=False per module default).
    params = {
        "wq": 0.1 * jax.random.normal(k3, (C, D_MODEL), dtype=jnp.float32),
        "wk": 0.1 * jax.random.normal(k4, (Kdim, D_MODEL), dtype=jnp.float32),
        "wv": 0.1 * jax.random.normal(k5, (Kdim, D_MODEL), dtype=jnp.float32),
        "wo": 0.1 * jax.random.normal(k6, (D_MODEL, D_MODEL), dtype=jnp.float32),
    }

    out = source_target_attention(query_img, memory, lengths, params, D_MODEL)
    out = jax.block_until_ready(out)

    ref = reference(query_img, memory, lengths, params, D_MODEL)
    assert out.shape == (B, D_MODEL, H, W)
    # Tolerance relaxed from 1e-4 to 2e-3 to accommodate the approx (EUP) softmax
    # reciprocal (~1e-3 relative error on the normalization).
    assert jnp.allclose(out, ref, atol=2e-3, rtol=2e-3)
    print("KERNEL_OK")
</pallas_src>

<mosaic_0001>
module attributes {stable_mosaic.version = 11 : i64} {
  func.func @attention_kernel(%arg0: i32, %arg1: memref<2xi32, #tpu.memory_space<smem>>, %arg2: memref<1x4x16xf32, #tpu.memory_space<vmem>>, %arg3: memref<1x8x8xf32, #tpu.memory_space<vmem>>, %arg4: memref<32x4xf32, #tpu.memory_space<vmem>>, %arg5: memref<8x64xf32, #tpu.memory_space<vmem>>, %arg6: memref<32x32xf32, #tpu.memory_space<vmem>>, %arg7: memref<1x32x16xf32, #tpu.memory_space<vmem>>) attributes {dimension_semantics = [#tpu.dimension_semantics<parallel>], iteration_bounds = array<i64: 2>, scalar_prefetch = 1 : i64, scratch_operands = 0 : i64, tpu.core_type = #tpu.core_type<tc>, window_params = [{transform_indices = @transform_0, window_bounds = array<i64: 1, 4, 16>}, {transform_indices = @transform_1, window_bounds = array<i64: 1, 8, 8>}, {pipeline_mode = #tpu.pipeline_mode<synchronous>, transform_indices = @transform_2, window_bounds = array<i64: 32, 4>}, {pipeline_mode = #tpu.pipeline_mode<synchronous>, transform_indices = @transform_3, window_bounds = array<i64: 8, 64>}, {pipeline_mode = #tpu.pipeline_mode<synchronous>, transform_indices = @transform_4, window_bounds = array<i64: 32, 32>}, {transform_indices = @transform_5, window_bounds = array<i64: 1, 32, 16>}]} {
    %0 = arith.index_cast %arg0 : i32 to index
    %1 = memref.load %arg1[%0] : memref<2xi32, #tpu.memory_space<smem>>
    %c0 = arith.constant 0 : index
    %c0_0 = arith.constant 0 : index
    %c0_1 = arith.constant 0 : index
    %2 = vector.load %arg2[%c0, %c0_0, %c0_1] : memref<1x4x16xf32, #tpu.memory_space<vmem>>, vector<1x4x16xf32>
    %3 = vector.shape_cast %2 : vector<1x4x16xf32> to vector<4x16xf32>
    %c0_2 = arith.constant 0 : index
    %c0_3 = arith.constant 0 : index
    %c0_4 = arith.constant 0 : index
    %4 = vector.load %arg3[%c0_2, %c0_3, %c0_4] : memref<1x8x8xf32, #tpu.memory_space<vmem>>, vector<1x8x8xf32>
    %5 = vector.shape_cast %4 : vector<1x8x8xf32> to vector<8x8xf32>
    %c0_5 = arith.constant 0 : index
    %c0_6 = arith.constant 0 : index
    %6 = vector.load %arg4[%c0_5, %c0_6] : memref<32x4xf32, #tpu.memory_space<vmem>>, vector<32x4xf32>
    %cst = arith.constant dense<0.000000e+00> : vector<32x16xf32>
    %7 = tpu.matmul %6, %3, %cst {dimension_numbers = #tpu.dot_dimension_numbers<[1], [0], [0], [1], [0, 0, 1, 1], [], []>} : vector<32x4xf32>, vector<4x16xf32>, vector<32x16xf32> -> vector<32x16xf32>
    %c0_7 = arith.constant 0 : index
    %c0_8 = arith.constant 0 : index
    %8 = vector.load %arg5[%c0_7, %c0_8] : memref<8x64xf32, #tpu.memory_space<vmem>>, vector<8x64xf32>
    %cst_9 = arith.constant dense<0.000000e+00> : vector<8x64xf32>
    %9 = tpu.matmul %5, %8, %cst_9 {dimension_numbers = #tpu.dot_dimension_numbers<[1], [0], [0], [1], [0, 0, 1, 1], [], []>} : vector<8x8xf32>, vector<8x64xf32>, vector<8x64xf32> -> vector<8x64xf32>
    %10 = vector.extract_strided_slice %9 {offsets = [0, 0], sizes = [8, 32], strides = [1, 1]} : vector<8x64xf32> to vector<8x32xf32>
    %11 = vector.extract_strided_slice %9 {offsets = [0, 32], sizes = [8, 32], strides = [1, 1]} : vector<8x64xf32> to vector<8x32xf32>
    %cst_10 = arith.constant dense<0.000000e+00> : vector<8x16xf32>
    %12 = tpu.matmul %10, %7, %cst_10 {dimension_numbers = #tpu.dot_dimension_numbers<[1], [0], [0], [1], [0, 0, 1, 1], [], []>} : vector<8x32xf32>, vector<32x16xf32>, vector<8x16xf32> -> vector<8x16xf32>
    %cst_11 = arith.constant 0.176776692 : f32
    %13 = vector.broadcast %cst_11 : f32 to vector<8x16xf32>
    %14 = arith.mulf %12, %13 : vector<8x16xf32>
    %15 = tpu.iota {dimensions = array<i32: 0>} : vector<8x16xi32>
    %16 = vector.broadcast %1 : i32 to vector<8x16xi32>
    %17 = arith.cmpi sge, %15, %16 : vector<8x16xi32>
    %cst_12 = arith.constant -3.40282347E+38 : f32
    %18 = vector.broadcast %cst_12 : f32 to vector<8x16xf32>
    %19 = arith.select %17, %18, %14 : vector<8x16xi1>, vector<8x16xf32>
    %cst_13 = arith.constant dense<0xFF800000> : vector<16xf32>
    %20 = vector.multi_reduction <maximumf>, %19, %cst_13 [0] : vector<8x16xf32> to vector<16xf32>
    %21 = vector.shape_cast %20 : vector<16xf32> to vector<1x16xf32>
    %22 = vector.broadcast %21 : vector<1x16xf32> to vector<8x16xf32>
    %23 = arith.subf %19, %22 : vector<8x16xf32>
    %24 = math.exp %23 : vector<8x16xf32>
    %cst_14 = arith.constant dense<0.000000e+00> : vector<16xf32>
    %25 = vector.multi_reduction <add>, %24, %cst_14 [0] : vector<8x16xf32> to vector<16xf32>
    %26 = vector.shape_cast %25 : vector<16xf32> to vector<1x16xf32>
    %27 = tpu.reciprocal %26 {approx = true} : vector<1x16xf32> -> vector<1x16xf32>
    %28 = vector.broadcast %27 : vector<1x16xf32> to vector<8x16xf32>
    %29 = arith.mulf %24, %28 : vector<8x16xf32>
    %30 = tpu.transpose %11, [1, 0] : vector<8x32xf32> -> vector<32x8xf32>
    %cst_15 = arith.constant dense<0.000000e+00> : vector<32x16xf32>
    %31 = tpu.matmul %30, %29, %cst_15 {dimension_numbers = #tpu.dot_dimension_numbers<[1], [0], [0], [1], [0, 0, 1, 1], [], []>} : vector<32x8xf32>, vector<8x16xf32>, vector<32x16xf32> -> vector<32x16xf32>
    %c0_16 = arith.constant 0 : index
    %c0_17 = arith.constant 0 : index
    %32 = vector.load %arg6[%c0_16, %c0_17] : memref<32x32xf32, #tpu.memory_space<vmem>>, vector<32x32xf32>
    %cst_18 = arith.constant dense<0.000000e+00> : vector<32x16xf32>
    %33 = tpu.matmul %32, %31, %cst_18 {dimension_numbers = #tpu.dot_dimension_numbers<[1], [0], [0], [1], [0, 0, 1, 1], [], []>} : vector<32x32xf32>, vector<32x16xf32>, vector<32x16xf32> -> vector<32x16xf32>
    %c0_19 = arith.constant 0 : index
    %c0_20 = arith.constant 0 : index
    %c0_21 = arith.constant 0 : index
    %34 = vector.load %arg7[%c0_19, %c0_20, %c0_21] : memref<1x32x16xf32, #tpu.memory_space<vmem>>, vector<1x32x16xf32>
    %35 = vector.shape_cast %34 : vector<1x32x16xf32> to vector<32x16xf32>
    %36 = vector.shape_cast %33 : vector<32x16xf32> to vector<1x32x16xf32>
    tpu.vector_store %arg7[%c0_19, %c0_20, %c0_21], %36 {strides = array<i32>} : memref<1x32x16xf32, #tpu.memory_space<vmem>>, vector<1x32x16xf32>,
    return
  }
  func.func @transform_0(%arg0: i32, %arg1: memref<2xi32, #tpu.memory_space<smem>>) -> (i32, i32, i32) {
    %c0_i32 = arith.constant 0 : i32
    %c0_i32_0 = arith.constant 0 : i32
    %c0_i32_1 = arith.constant 0 : i32
    return %arg0, %c0_i32, %c0_i32_0 : i32, i32, i32
  }
  func.func @transform_1(%arg0: i32, %arg1: memref<2xi32, #tpu.memory_space<smem>>) -> (i32, i32, i32) {
    %c0_i32 = arith.constant 0 : i32
    %c0_i32_0 = arith.constant 0 : i32
    %c0_i32_1 = arith.constant 0 : i32
    return %arg0, %c0_i32, %c0_i32_0 : i32, i32, i32
  }
  func.func @transform_2(%arg0: i32, %arg1: memref<2xi32, #tpu.memory_space<smem>>) -> (i32, i32) {
    %c0_i32 = arith.constant 0 : i32
    %c0_i32_0 = arith.constant 0 : i32
    %c0_i32_1 = arith.constant 0 : i32
    return %c0_i32, %c0_i32_0 : i32, i32
  }
  func.func @transform_3(%arg0: i32, %arg1: memref<2xi32, #tpu.memory_space<smem>>) -> (i32, i32) {
    %c0_i32 = arith.constant 0 : i32
    %c0_i32_0 = arith.constant 0 : i32
    %c0_i32_1 = arith.constant 0 : i32
    return %c0_i32, %c0_i32_0 : i32, i32
  }
  func.func @transform_4(%arg0: i32, %arg1: memref<2xi32, #tpu.memory_space<smem>>) -> (i32, i32) {
    %c0_i32 = arith.constant 0 : i32
    %c0_i32_0 = arith.constant 0 : i32
    %c0_i32_1 = arith.constant 0 : i32
    return %c0_i32, %c0_i32_0 : i32, i32
  }
  func.func @transform_5(%arg0: i32, %arg1: memref<2xi32, #tpu.memory_space<smem>>) -> (i32, i32, i32) {
    %c0_i32 = arith.constant 0 : i32
    %c0_i32_0 = arith.constant 0 : i32
    %c0_i32_1 = arith.constant 0 : i32
    return %arg0, %c0_i32, %c0_i32_0 : i32, i32, i32
  }
}

</mosaic_0001>

<llo_original>
// kernel: tpu_custom_call.1
$region0: #{tpu_custom_call.1}
  #allocation0 [shape = 'u32[]', space=smem, size = 0x4, offset = 0x4, fixed_abs, tag = 'smem constant byte address 0x4 - core index']
  #allocation1 [shape = 'u32[144,128]{1,0:T(1,128)}', space=vmem, size = 0x12000, scoped, tag = 'internal scratch']
  #allocation2 [shape = 's32[1]{0}', space=sflag, size = 0x4, scoped, tag = 'scoped memory for tpu_custom_call.1']
  #allocation3 [shape = 'u8[512]{0}', space=smem, size = 0x200, scoped, tag = 'prefetched SMEM operand 0']
  %s0 = inlined_call_operand.vmem [shape: s32[2], index: 0, kind: input, shape index: {}]
  %s1 = inlined_call_operand.hbm [shape: f32[2,4,16], index: 1, kind: input, shape index: {}]
  %s2 = inlined_call_operand.vmem [shape: f32[2,8,8], index: 2, kind: input, shape index: {}]
  %s3 = inlined_call_operand.vmem [shape: f32[32,4], index: 3, kind: input, shape index: {}]
  %s4 = inlined_call_operand.hbm [shape: f32[8,64], index: 4, kind: input, shape index: {}]
  %s5 = inlined_call_operand.vmem [shape: f32[32,32], index: 5, kind: input, shape index: {}]
  %s6 = inlined_call_operand.vmem [shape: f32[2,32,16], index: 6, kind: output, shape index: {}]
  %s7 = sld [smem:[#allocation0]]
  $region61: #{tpu_custom_call.1} parent=0
    _
  %s9 = ssub.s32 1, %s7
  %s10 = scalar_select 0, %s9, %s7
  %s11 = sshll.u32 %s0, 4
  %s12 = int_to_ptr.vmem [resolvable:$true] %s11
  %14 = dma.vmem_to_smem %s12, 16, [#allocation3], [#allocation2]
  %15 = dma.done [#allocation2], 16
  %16 = sfence
  $region1: #{tpu_custom_call.1} parent=0
    #allocation4 [shape = 'u8[4096]{0}', space=vmem, size = 0x1000, scoped, tag = 'input window, operand 1']
    #allocation5 [shape = 's32[2]{0}', space=sflag, size = 0x8, scoped, tag = 'scoped memory for tpu_custom_call.1']
    #allocation6 [shape = 'u8[4096]{0}', space=vmem, size = 0x1000, scoped, tag = 'input window, operand 4, single buffered']
    #allocation7 [shape = 's32[1]{0}', space=sflag, size = 0x4, scoped, tag = 'scoped memory for tpu_custom_call.1']
    %17 = vsyncpa [#allocation5], 0
    %s18 = scalar_lea.sflag [#allocation5], 1
    %19 = vsyncpa %s18, 0
    %20 = vsyncpa [#allocation7], 0
    loop: start=0, step=1, limit=4
    $region2: #{tpu_custom_call.1} parent=1 // loop_pre_header
      _
    $region3: #{tpu_custom_call.1} parent=1 // loop_header
      %s22 = sphi 0, %s26
      %p23 = scmp.ge.s32.totalorder %s22, 4
      %s32 = sphi 0, %s34
      %s35 = sphi 0, %s32
      %s36 = sphi 0, %s35
      %s52 = sphi 0, %s36
      %s58 = sphi 0, %s60
      %s61 = sphi 0, %s58
      %s62 = sphi 0, %s61
      %s78 = sphi 0, %s62
      %s82 = sphi 0, %s82
      %s84 = sphi 0, %s82
      %s85 = sphi 0, %s84
      %s99 = sphi 0, %s85
      %s103 = sphi 0, %s103
      %s105 = sphi 0, %s103
      %s106 = sphi 0, %s105
      %s120 = sphi 0, %s106
      %s124 = sphi 0, %s124
      %s126 = sphi 0, %s124
      %s127 = sphi 0, %s126
      %s141 = sphi 0, %s127
      %s147 = sphi 0, %s149
      %s150 = sphi 0, %s147
      %s151 = sphi 0, %s150
      %s167 = sphi 0, %s151
    $region4: #{tpu_custom_call.1} parent=1 // loop_header_branch
      %25 = sbr.rel (%p23) target = $region8
    $region5: #{tpu_custom_call.1} parent=1 // loop_body
      %s27 = ssub.s32 %s22, 1
      %s28 = ssub.s32 %s22, 2
      %s29 = sadd.s32 %s22, 1
      %s30 = ssub.s32 %s22, %s29
      %p31 = scmp.eq.s32.totalorder %s30, 0
      %s33 = sadd.s32 %s32, 1
      %s34 = scalar_select %p31, %s32, %s33
      %p37 = pneg %p31
      %p38 = scmp.eq.s32.totalorder %s22, 1
      %p39 = por %p37, %p38
      %p40 = scmp.ne.s32.totalorder %s32, %s35
      %p41 = scmp.eq.s32.totalorder %s22, 0
      %p42 = por %p40, %p41
      %p43 = scmp.ne.s32.totalorder %s32, %s35
      %p44 = scmp.eq.s32.totalorder %s27, 1
      %p45 = por %p43, %p44
      %p46 = scmp.ne.s32.totalorder %s35, %s36
      %p47 = scmp.eq.s32.totalorder %s27, 0
      %p48 = por %p46, %p47
      %p49 = scmp.ne.s32.totalorder %s35, %s36
      %p50 = scmp.eq.s32.totalorder %s28, 1
      %p51 = por %p49, %p50
      %p53 = scmp.ne.s32.totalorder %s36, %s52
      %p54 = scmp.eq.s32.totalorder %s28, 0
      %p55 = por %p53, %p54
      %s56 = ssub.s32 %s22, %s29
      %p57 = scmp.eq.s32.totalorder %s56, 0
      %s59 = sadd.s32 %s58, 1
      %s60 = scalar_select %p57, %s58, %s59
      %p63 = pneg %p57
      %p64 = scmp.eq.s32.totalorder %s22, 1
      %p65 = por %p63, %p64
      %p66 = scmp.ne.s32.totalorder %s58, %s61
      %p67 = scmp.eq.s32.totalorder %s22, 0
      %p68 = por %p66, %p67
      %p69 = scmp.ne.s32.totalorder %s58, %s61
      %p70 = scmp.eq.s32.totalorder %s27, 1
      %p71 = por %p69, %p70
      %p72 = scmp.ne.s32.totalorder %s61, %s62
      %p73 = scmp.eq.s32.totalorder %s27, 0
      %p74 = por %p72, %p73
      %p75 = scmp.ne.s32.totalorder %s61, %s62
      %p76 = scmp.eq.s32.totalorder %s28, 1
      %p77 = por %p75, %p76
      %p79 = scmp.ne.s32.totalorder %s62, %s78
      %p80 = scmp.eq.s32.totalorder %s28, 0
      %p81 = por %p79, %p80
      %s83 = sadd.s32 %s82, 1
      %p86 = scmp.eq.s32.totalorder %s22, 1
      %p87 = scmp.ne.s32.totalorder %s82, %s84
      %p88 = scmp.eq.s32.totalorder %s22, 0
      %p89 = por %p87, %p88
      %p90 = scmp.ne.s32.totalorder %s82, %s84
      %p91 = scmp.eq.s32.totalorder %s27, 1
      %p92 = por %p90, %p91
      %p93 = scmp.ne.s32.totalorder %s84, %s85
      %p94 = scmp.eq.s32.totalorder %s27, 0
      %p95 = por %p93, %p94
      %p96 = scmp.ne.s32.totalorder %s84, %s85
      %p97 = scmp.eq.s32.totalorder %s28, 1
      %p98 = por %p96, %p97
      %p100 = scmp.ne.s32.totalorder %s85, %s99
      %p101 = scmp.eq.s32.totalorder %s28, 0
      %p102 = por %p100, %p101
      %s104 = sadd.s32 %s103, 1
      %p107 = scmp.eq.s32.totalorder %s22, 1
      %p108 = scmp.ne.s32.totalorder %s103, %s105
      %p109 = scmp.eq.s32.totalorder %s22, 0
      %p110 = por %p108, %p109
      %p111 = scmp.ne.s32.totalorder %s103, %s105
      %p112 = scmp.eq.s32.totalorder %s27, 1
      %p113 = por %p111, %p112
      %p114 = scmp.ne.s32.totalorder %s105, %s106
      %p115 = scmp.eq.s32.totalorder %s27, 0
      %p116 = por %p114, %p115
      %p117 = scmp.ne.s32.totalorder %s105, %s106
      %p118 = scmp.eq.s32.totalorder %s28, 1
      %p119 = por %p117, %p118
      %p121 = scmp.ne.s32.totalorder %s106, %s120
      %p122 = scmp.eq.s32.totalorder %s28, 0
      %p123 = por %p121, %p122
      %s125 = sadd.s32 %s124, 1
      %p128 = scmp.eq.s32.totalorder %s22, 1
      %p129 = scmp.ne.s32.totalorder %s124, %s126
      %p130 = scmp.eq.s32.totalorder %s22, 0
      %p131 = por %p129, %p130
      %p132 = scmp.ne.s32.totalorder %s124, %s126
      %p133 = scmp.eq.s32.totalorder %s27, 1
      %p134 = por %p132, %p133
      %p135 = scmp.ne.s32.totalorder %s126, %s127
      %p136 = scmp.eq.s32.totalorder %s27, 0
      %p137 = por %p135, %p136
      %p138 = scmp.ne.s32.totalorder %s126, %s127
      %p139 = scmp.eq.s32.totalorder %s28, 1
      %p140 = por %p138, %p139
      %p142 = scmp.ne.s32.totalorder %s127, %s141
      %p143 = scmp.eq.s32.totalorder %s28, 0
      %p144 = por %p142, %p143
      %s145 = ssub.s32 %s22, %s29
      %p146 = scmp.eq.s32.totalorder %s145, 0
      %s148 = sadd.s32 %s147, 1
      %s149 = scalar_select %p146, %s147, %s148
      %p152 = pneg %p146
      %p153 = scmp.eq.s32.totalorder %s22, 1
      %p154 = por %p152, %p153
      %p155 = scmp.ne.s32.totalorder %s147, %s150
      %p156 = scmp.eq.s32.totalorder %s22, 0
      %p157 = por %p155, %p156
      %p158 = scmp.ne.s32.totalorder %s147, %s150
      %p159 = scmp.eq.s32.totalorder %s27, 1
      %p160 = por %p158, %p159
      %p161 = scmp.ne.s32.totalorder %s150, %s151
      %p162 = scmp.eq.s32.totalorder %s27, 0
      %p163 = por %p161, %p162
      %p164 = scmp.ne.s32.totalorder %s150, %s151
      %p165 = scmp.eq.s32.totalorder %s28, 1
      %p166 = por %p164, %p165
      %p168 = scmp.ne.s32.totalorder %s151, %s167
      %p169 = scmp.eq.s32.totalorder %s28, 0
      %p170 = por %p168, %p169
      %p171 = scmp.le.s32.totalorder 1, %s22
      %p172 = scmp.lt.s32.totalorder %s22, 3
      %p173 = pnand %p171, %p172
      %p174 = pneg %p173
      // Predicated region
      $region9: #{tpu_custom_call.1} parent=5 // pred_check
        _
      $region10: #{tpu_custom_call.1} parent=5 // pred_check_branch
        %176 = sbr.rel (%p173) target = $region12
      $region11: #{tpu_custom_call.1} parent=5 // pred_region
        %s177 = ssub.s32 %s22, 1
        // Predicated region
        $region13: #{tpu_custom_call.1} parent=11 // pred_check
          %p178 = pneg %p95
        $region14: #{tpu_custom_call.1} parent=11 // pred_check_branch
          %180 = sbr.rel (%p178) target = $region16
        $region15: #{tpu_custom_call.1} parent=11 // pred_region
          _
        $region16: #{tpu_custom_call.1} parent=11 // pred_fallthru
          _
        // Predicated region
        $region17: #{tpu_custom_call.1} parent=11 // pred_check
          %p181 = pneg %p116
        $region18: #{tpu_custom_call.1} parent=11 // pred_check_branch
          %183 = sbr.rel (%p181) target = $region20
        $region19: #{tpu_custom_call.1} parent=11 // pred_region
          %s185 = ssub.s32 128, 128
          %186 = vsyncadd [#allocation7], %s185
          %s188 = sshll.u32 [#allocation6], 4
          %s189 = int_to_ptr.vmem [resolvable:$true] %s188
          %191 = dma.hbm_to_vmem [thread:$0]  %s4, 128, %s189, [#allocation7]
        $region20: #{tpu_custom_call.1} parent=11 // pred_fallthru
          _
        // Predicated region
        $region21: #{tpu_custom_call.1} parent=11 // pred_check
          %p192 = pneg %p137
        $region22: #{tpu_custom_call.1} parent=11 // pred_check_branch
          %194 = sbr.rel (%p192) target = $region24
        $region23: #{tpu_custom_call.1} parent=11 // pred_region
          _
        $region24: #{tpu_custom_call.1} parent=11 // pred_fallthru
          _
      $region12: #{tpu_custom_call.1} parent=5 // pred_fallthru
        _
      %p195 = scmp.lt.s32.totalorder %s22, 2
      // Predicated region
      $region25: #{tpu_custom_call.1} parent=5 // pred_check
        %p196 = pneg %p195
      $region26: #{tpu_custom_call.1} parent=5 // pred_check_branch
        %198 = sbr.rel (%p196) target = $region28
      $region27: #{tpu_custom_call.1} parent=5 // pred_region
        // Predicated region
        $region29: #{tpu_custom_call.1} parent=27 // pred_check
          %p199 = pneg %p42
        $region30: #{tpu_custom_call.1} parent=27 // pred_check_branch
          %201 = sbr.rel (%p199) target = $region32
        $region31: #{tpu_custom_call.1} parent=27 // pred_region
          %s202 = sand.u32 %s32, 1
          %s203 = scalar_lea.sflag [#allocation5], %s202
          %s204 = sand.u32 %s32, 1
          %s205 = smul.addr %s204, 4
          %s206 = scalar_lea.vmem [#allocation4], %s205
          %s208 = ssub.s32 64, 64
          %209 = vsyncadd %s203, %s208
          %s210 = smul.addr %s22, 64
          %s211 = scalar_lea.hbm %s1, %s210
          %s213 = sshll.u32 %s206, 4
          %s214 = int_to_ptr.vmem [resolvable:$true] %s213
          %216 = dma.hbm_to_vmem [thread:$0]  %s211, 64, %s214, %s203
        $region32: #{tpu_custom_call.1} parent=27 // pred_fallthru
          _
        // Predicated region
        $region33: #{tpu_custom_call.1} parent=27 // pred_check
          %p217 = pneg %p68
        $region34: #{tpu_custom_call.1} parent=27 // pred_check_branch
          %219 = sbr.rel (%p217) target = $region36
        $region35: #{tpu_custom_call.1} parent=27 // pred_region
          %p220 = scmp.lt.s32.totalorder %s22, 1
          %s221 = scalar_select %p220, %s22, 1
          %s222 = smul.addr %s221, 8
          %s223 = scalar_lea.vmem %s2, %s222
        $region36: #{tpu_custom_call.1} parent=27 // pred_fallthru
          _
      $region28: #{tpu_custom_call.1} parent=5 // pred_fallthru
        _
      %p224 = scmp.le.s32.totalorder 1, %s22
      %p225 = scmp.lt.s32.totalorder %s22, 3
      %p226 = pnand %p224, %p225
      %p227 = pneg %p226
      // Predicated region
      $region37: #{tpu_custom_call.1} parent=5 // pred_check
        _
      $region38: #{tpu_custom_call.1} parent=5 // pred_check_branch
        %229 = sbr.rel (%p226) target = $region40
      $region39: #{tpu_custom_call.1} parent=5 // pred_region
        %s230 = ssub.s32 %s22, 1
        %s231 = sand.u32 %s35, 1
        %s232 = scalar_lea.sflag [#allocation5], %s231
        %s233 = sand.u32 %s35, 1
        %s234 = smul.addr %s233, 4
        %s235 = scalar_lea.vmem [#allocation4], %s234
        // Predicated region
        $region41: #{tpu_custom_call.1} parent=39 // pred_check
          %p236 = pneg %p48
        $region42: #{tpu_custom_call.1} parent=39 // pred_check_branch
          %238 = sbr.rel (%p236) target = $region44
        $region43: #{tpu_custom_call.1} parent=39 // pred_region
          %239 = dma.done %s232, 64
        $region44: #{tpu_custom_call.1} parent=39 // pred_fallthru
          _
        // Predicated region
        $region45: #{tpu_custom_call.1} parent=39 // pred_check
          %p240 = pneg %p116
        $region46: #{tpu_custom_call.1} parent=39 // pred_check_branch
          %242 = sbr.rel (%p240) target = $region48
        $region47: #{tpu_custom_call.1} parent=39 // pred_region
          %243 = dma.done [#allocation7], 128
        $region48: #{tpu_custom_call.1} parent=39 // pred_fallthru
          _
        %s244 = sand.u32 %s35, 1
        %s245 = scalar_lea.sflag [#allocation5], %s244
        %s246 = sand.u32 %s35, 1
        %s247 = smul.addr %s246, 4
        %s248 = scalar_lea.vmem [#allocation4], %s247
        %p249 = pneg %p48
        %p250 = pneg %p45
        %p251 = scmp.lt.s32.totalorder %s27, 1
        %s252 = scalar_select %p251, %s27, 1
        %s253 = smul.addr %s252, 8
        %s254 = scalar_lea.vmem %s2, %s253
        %p255 = pneg %p74
        %p256 = pneg %p71
        %p257 = pneg %p95
        %p258 = pneg %p92
        %p259 = pneg %p116
        %p260 = pneg %p113
        %p261 = pneg %p137
        %p262 = pneg %p134
        %p263 = pneg %p163
        %p264 = pneg %p160
        %p265 = scmp.lt.s32.totalorder %s27, 1
        %s266 = scalar_select %p265, %s27, 1
        %s267 = smul.addr %s266, 4
        %s268 = smul.addr %s267, 8
        %s269 = scalar_lea.vmem %s6, %s268
        %p270 = scmp.lt.s32.totalorder %s27, 1
        %s271 = scalar_select %p270, %s27, 1
        %s272 = smul.addr %s271, 8
        %s273 = scalar_lea.vmem %s2, %s272
        %p274 = scmp.lt.s32.totalorder %s27, 1
        %s275 = scalar_select %p274, %s27, 1
        %s276 = smul.addr %s275, 4
        %s277 = smul.addr %s276, 8
        %s278 = scalar_lea.vmem %s6, %s277
        %s279 = sld [smem:[#allocation3 + %s27]]
        %v280 = vld [vmem:[%s235] sm:$0xf]
        %v281 = vld [vmem:[%s273] sm:$0xff]
        %v282 = vld [vmem:[%s3] sm:$0xff]
        %v283 = vld [vmem:[%s3 + $0x8] sm:$0xff]
        %v284 = vld [vmem:[%s3 + $0x10] sm:$0xff]
        %v285 = vld [vmem:[%s3 + $0x18] sm:$0xff]
        %vm286 = vcmask 31744
        %v288 = vsel %vm286, %v282, 0
        %v291 = vsel %vm286, %v283, 0
        %v294 = vsel %vm286, %v284, 0
        %v297 = vsel %vm286, %v285, 0
        %vm299 = vcmask 1043456
        %v301 = vsel %vm299, %v280, 0
        %303 = vmatprep.subr.mxu0 0.0
        %304 = vmatpush1.msra.mxu0 %v301
        %305 = vmatprep.subr.mxu0 0.0
        %306 = vmatpush1.msra.mxu0 0.0
        %307 = vmatprep.subr.mxu0 0.0
        %308 = vmatpush1.msra.mxu0 0.0
        %309 = vmatprep.subr.mxu0 0.0
        %310 = vmatpush1.msra.mxu0 0.0
        %311 = vmatprep.subr.mxu0 0.0
        %312 = vmatpush1.msra.mxu0 0.0
        %313 = vmatprep.subr.mxu0 0.0
        %314 = vmatpush1.msra.mxu0 0.0
        %315 = vmatprep.subr.mxu0 0.0
        %316 = vmatpush1.msra.mxu0 0.0
        %317 = vmatprep.subr.mxu0 0.0
        %318 = vmatpush1.msra.mxu0 0.0
        %319 = vmatprep.subr.mxu0 0.0
        %320 = vmatpush1.msra.mxu0 0.0
        %321 = vmatprep.subr.mxu0 0.0
        %322 = vmatpush1.msra.mxu0 0.0
        %323 = vmatprep.subr.mxu0 0.0
        %324 = vmatpush1.msra.mxu0 0.0
        %325 = vmatprep.subr.mxu0 0.0
        %326 = vmatpush1.msra.mxu0 0.0
        %327 = vmatprep.subr.mxu0 0.0
        %328 = vmatpush1.msra.mxu0 0.0
        %329 = vmatprep.subr.mxu0 0.0
        %330 = vmatpush1.msra.mxu0 0.0
        %331 = vmatprep.subr.mxu0 0.0
        %332 = vmatpush1.msra.mxu0 0.0
        %333 = vmatprep.subr.mxu0 0.0
        %334 = vmatpush1.msra.mxu0 0.0
        %335 = vmatprep.subr.mxu0 0.0
        %336 = vmatpush1.msra.mxu0 0.0
        %337 = vmatprep.subr.mxu0 0.0
        %338 = vmatpush1.msra.mxu0 0.0
        %339 = vmatprep.subr.mxu0 0.0
        %340 = vmatpush1.msra.mxu0 0.0
        %341 = vmatprep.subr.mxu0 0.0
        %342 = vmatpush1.msra.mxu0 0.0
        %343 = vmatprep.subr.mxu0 0.0
        %344 = vmatpush1.msra.mxu0 0.0
        %345 = vmatprep.subr.mxu0 0.0
        %346 = vmatpush1.msra.mxu0 0.0
        %347 = vmatprep.subr.mxu0 0.0
        %348 = vmatpush1.msra.mxu0 0.0
        %349 = vmatprep.subr.mxu0 0.0
        %350 = vmatpush1.msra.mxu0 0.0
        %351 = vmatprep.subr.mxu0 0.0
        %352 = vmatpush1.msra.mxu0 0.0
        %353 = vmatprep.subr.mxu0 0.0
        %354 = vmatpush1.msra.mxu0 0.0
        %355 = vmatprep.subr.mxu0 0.0
        %356 = vmatpush1.msra.mxu0 0.0
        %357 = vmatprep.subr.mxu0 0.0
        %358 = vmatpush1.msra.mxu0 0.0
        %359 = vmatprep.subr.mxu0 0.0
        %360 = vmatpush1.msra.mxu0 0.0
        %361 = vmatprep.subr.mxu0 0.0
        %362 = vmatpush1.msra.mxu0 0.0
        %363 = vmatprep.subr.mxu0 0.0
        %364 = vmatpush1.msra.mxu0 0.0
        %365 = vmatprep.subr.mxu0 0.0
        %366 = vmatpush1.msra.mxu0 0.0
        %367 = vmatprep.mubr.f32.mxu0 0.0
        %368 = vmatmul.mubr.f32.gmra.mrb[0].mxu0 %v288
        %v369 = vpop.f32.mrb[0].mxu0
        %v370 = vadd.f32 0.0, %v369
        %v371 = vpop.f32.mrb[0].mxu0
        %372 = vmatprep.mubr.f32.mxu0 0.0
        %373 = vmatmul.mubr.f32.gmra.mrb[0].mxu0 %v291
        %v374 = vpop.f32.mrb[0].mxu0
        %v375 = vadd.f32 0.0, %v374
        %v376 = vpop.f32.mrb[0].mxu0
        %377 = vmatprep.mubr.f32.mxu0 0.0
        %378 = vmatmul.mubr.f32.gmra.mrb[0].mxu0 %v294
        %v379 = vpop.f32.mrb[0].mxu0
        %v380 = vadd.f32 0.0, %v379
        %v381 = vpop.f32.mrb[0].mxu0
        %382 = vmatprep.mubr.f32.mxu0 0.0
        %383 = vmatmul.mubr.f32.gmra.mrb[0].mxu0 %v297
        %v384 = vpop.f32.mrb[0].mxu0
        %v385 = vadd.f32 0.0, %v384
        %v386 = vpop.f32.mrb[0].mxu0
        %387 = vdwg.mxu0
        %v388 = vld [vmem:[#allocation6] sm:$0xff]
        %vm389 = vcmask 64512
        %v391 = vsel %vm389, %v281, 0
        %393 = vmatprep.subr.mxu0 0.0
        %394 = vmatpush1.msra.mxu0 %v388
        %395 = vmatprep.subr.mxu0 0.0
        %396 = vmatpush1.msra.mxu0 0.0
        %397 = vmatprep.subr.mxu0 0.0
        %398 = vmatpush1.msra.mxu0 0.0
        %399 = vmatprep.subr.mxu0 0.0
        %400 = vmatpush1.msra.mxu0 0.0
        %401 = vmatprep.subr.mxu0 0.0
        %402 = vmatpush1.msra.mxu0 0.0
        %403 = vmatprep.subr.mxu0 0.0
        %404 = vmatpush1.msra.mxu0 0.0
        %405 = vmatprep.subr.mxu0 0.0
        %406 = vmatpush1.msra.mxu0 0.0
        %407 = vmatprep.subr.mxu0 0.0
        %408 = vmatpush1.msra.mxu0 0.0
        %409 = vmatprep.subr.mxu0 0.0
        %410 = vmatpush1.msra.mxu0 0.0
        %411 = vmatprep.subr.mxu0 0.0
        %412 = vmatpush1.msra.mxu0 0.0
        %413 = vmatprep.subr.mxu0 0.0
        %414 = vmatpush1.msra.mxu0 0.0
        %415 = vmatprep.subr.mxu0 0.0
        %416 = vmatpush1.msra.mxu0 0.0
        %417 = vmatprep.subr.mxu0 0.0
        %418 = vmatpush1.msra.mxu0 0.0
        %419 = vmatprep.subr.mxu0 0.0
        %420 = vmatpush1.msra.mxu0 0.0
        %421 = vmatprep.subr.mxu0 0.0
        %422 = vmatpush1.msra.mxu0 0.0
        %423 = vmatprep.subr.mxu0 0.0
        %424 = vmatpush1.msra.mxu0 0.0
        %425 = vmatprep.subr.mxu0 0.0
        %426 = vmatpush1.msra.mxu0 0.0
        %427 = vmatprep.subr.mxu0 0.0
        %428 = vmatpush1.msra.mxu0 0.0
        %429 = vmatprep.subr.mxu0 0.0
        %430 = vmatpush1.msra.mxu0 0.0
        %431 = vmatprep.subr.mxu0 0.0
        %432 = vmatpush1.msra.mxu0 0.0
        %433 = vmatprep.subr.mxu0 0.0
        %434 = vmatpush1.msra.mxu0 0.0
        %435 = vmatprep.subr.mxu0 0.0
        %436 = vmatpush1.msra.mxu0 0.0
        %437 = vmatprep.subr.mxu0 0.0
        %438 = vmatpush1.msra.mxu0 0.0
        %439 = vmatprep.subr.mxu0 0.0
        %440 = vmatpush1.msra.mxu0 0.0
        %441 = vmatprep.subr.mxu0 0.0
        %442 = vmatpush1.msra.mxu0 0.0
        %443 = vmatprep.subr.mxu0 0.0
        %444 = vmatpush1.msra.mxu0 0.0
        %445 = vmatprep.subr.mxu0 0.0
        %446 = vmatpush1.msra.mxu0 0.0
        %447 = vmatprep.subr.mxu0 0.0
        %448 = vmatpush1.msra.mxu0 0.0
        %449 = vmatprep.subr.mxu0 0.0
        %450 = vmatpush1.msra.mxu0 0.0
        %451 = vmatprep.subr.mxu0 0.0
        %452 = vmatpush1.msra.mxu0 0.0
        %453 = vmatprep.subr.mxu0 0.0
        %454 = vmatpush1.msra.mxu0 0.0
        %455 = vmatprep.subr.mxu0 0.0
        %456 = vmatpush1.msra.mxu0 0.0
        %457 = vmatprep.mubr.f32.mxu0 0.0
        %458 = vmatmul.mubr.f32.gmra.mrb[0].mxu0 %v391
        %v459 = vpop.f32.mrb[0].mxu0
        %v460 = vadd.f32 0.0, %v459
        %v461 = vpop.f32.mrb[0].mxu0
        %462 = vdwg.mxu0
        %vm463 = vcmask 261120
        %v465 = vsel %vm463, %v460, 0
        %467 = vmatprep.subr.mxu0 0.0
        %468 = vmatpush1.msra.mxu0 %v370
        %469 = vmatprep.subr.mxu0 0.0
        %470 = vmatpush1.msra.mxu0 %v375
        %471 = vmatprep.subr.mxu0 0.0
        %472 = vmatpush1.msra.mxu0 %v380
        %473 = vmatprep.subr.mxu0 0.0
        %474 = vmatpush1.msra.mxu0 %v385
        %475 = vmatprep.subr.mxu0 0.0
        %476 = vmatpush1.msra.mxu0 0.0
        %477 = vmatprep.subr.mxu0 0.0
        %478 = vmatpush1.msra.mxu0 0.0
        %479 = vmatprep.subr.mxu0 0.0
        %480 = vmatpush1.msra.mxu0 0.0
        %481 = vmatprep.subr.mxu0 0.0
        %482 = vmatpush1.msra.mxu0 0.0
        %483 = vmatprep.subr.mxu0 0.0
        %484 = vmatpush1.msra.mxu0 0.0
        %485 = vmatprep.subr.mxu0 0.0
        %486 = vmatpush1.msra.mxu0 0.0
        %487 = vmatprep.subr.mxu0 0.0
        %488 = vmatpush1.msra.mxu0 0.0
        %489 = vmatprep.subr.mxu0 0.0
        %490 = vmatpush1.msra.mxu0 0.0
        %491 = vmatprep.subr.mxu0 0.0
        %492 = vmatpush1.msra.mxu0 0.0
        %493 = vmatprep.subr.mxu0 0.0
        %494 = vmatpush1.msra.mxu0 0.0
        %495 = vmatprep.subr.mxu0 0.0
        %496 = vmatpush1.msra.mxu0 0.0
        %497 = vmatprep.subr.mxu0 0.0
        %498 = vmatpush1.msra.mxu0 0.0
        %499 = vmatprep.subr.mxu0 0.0
        %500 = vmatpush1.msra.mxu0 0.0
        %501 = vmatprep.subr.mxu0 0.0
        %502 = vmatpush1.msra.mxu0 0.0
        %503 = vmatprep.subr.mxu0 0.0
        %504 = vmatpush1.msra.mxu0 0.0
        %505 = vmatprep.subr.mxu0 0.0
        %506 = vmatpush1.msra.mxu0 0.0
        %507 = vmatprep.subr.mxu0 0.0
        %508 = vmatpush1.msra.mxu0 0.0
        %509 = vmatprep.subr.mxu0 0.0
        %510 = vmatpush1.msra.mxu0 0.0
        %511 = vmatprep.subr.mxu0 0.0
        %512 = vmatpush1.msra.mxu0 0.0
        %513 = vmatprep.subr.mxu0 0.0
        %514 = vmatpush1.msra.mxu0 0.0
        %515 = vmatprep.subr.mxu0 0.0
        %516 = vmatpush1.msra.mxu0 0.0
        %517 = vmatprep.subr.mxu0 0.0
        %518 = vmatpush1.msra.mxu0 0.0
        %519 = vmatprep.subr.mxu0 0.0
        %520 = vmatpush1.msra.mxu0 0.0
        %521 = vmatprep.subr.mxu0 0.0
        %522 = vmatpush1.msra.mxu0 0.0
        %523 = vmatprep.subr.mxu0 0.0
        %524 = vmatpush1.msra.mxu0 0.0
        %525 = vmatprep.subr.mxu0 0.0
        %526 = vmatpush1.msra.mxu0 0.0
        %527 = vmatprep.subr.mxu0 0.0
        %528 = vmatpush1.msra.mxu0 0.0
        %529 = vmatprep.subr.mxu0 0.0
        %530 = vmatpush1.msra.mxu0 0.0
        %531 = vmatprep.mubr.f32.mxu0 0.0
        %532 = vmatmul.mubr.f32.gmra.mrb[0].mxu0 %v465
        %v533 = vpop.f32.mrb[0].mxu0
        %v534 = vadd.f32 0.0, %v533
        %v535 = vpop.f32.mrb[0].mxu0
        %536 = vdwg.mxu0
        %v537 = vmul.f32 %v534, 0.17677669
        %v538 = vlaneseq
        %v539 = vshrl.u32 %v538, 7
        %v540 = vstv %s279
        %vm541 = vcmp.ge.s32.totalorder %v539, %v540
        %v542 = vsel %vm541, -3.4028235e+38, %v537
        %vm543 = vcmask 130048
        %v544 = vsel %vm543, %v542, -inf
        %v545 = vrot.slane %v544, 4
        %v546 = vmax.f32 %v544, %v545
        %v547 = vrot.slane %v546, 2
        %v548 = vmax.f32 %v546, %v547
        %v549 = vrot.slane %v548, 1
        %v550 = vmax.f32 %v548, %v549
        %v551 = vsub.f32 %v542, %v550
        %v552 = vmul.f32 %v551, 1.442695
        %v553 = vpow.pop %v552
        %v554 = vsel %vm543, %v553, 0.0
        %v555 = vrot.slane %v554, 4
        %v556 = vadd.f32 %v554, %v555
        %v557 = vrot.slane %v556, 2
        %v558 = vadd.f32 %v556, %v557
        %v559 = vrot.slane %v558, 1
        %v560 = vadd.f32 %v558, %v559
        %v561 = vrcp.pop %v560
        %v562 = vmul.f32 %v553, %v561
        %563 = vrot.lane.b32.xlu0 %v460, 96
        %v564 = vpop.permute.xlu0 %563
        %566 = vxpose.xlu0.b32.start [1/16] %v564, 128
        %567 = vxpose.xlu0.b32.cont [2/16] 0.0, 128
        %568 = vxpose.xlu0.b32.cont [3/16] 0.0, 128
        %569 = vxpose.xlu0.b32.cont [4/16] 0.0, 128
        %570 = vxpose.xlu0.b32.cont [5/16] 0.0, 128
        %571 = vxpose.xlu0.b32.cont [6/16] 0.0, 128
        %572 = vxpose.xlu0.b32.cont [7/16] 0.0, 128
        %573 = vxpose.xlu0.b32.cont [8/16] 0.0, 128
        %574 = vxpose.xlu0.b32.cont [9/16] 0.0, 128
        %575 = vxpose.xlu0.b32.cont [10/16] 0.0, 128
        %576 = vxpose.xlu0.b32.cont [11/16] 0.0, 128
        %577 = vxpose.xlu0.b32.cont [12/16] 0.0, 128
        %578 = vxpose.xlu0.b32.cont [13/16] 0.0, 128
        %579 = vxpose.xlu0.b32.cont [14/16] 0.0, 128
        %580 = vxpose.xlu0.b32.cont [15/16] 0.0, 128
        %581 = vxpose.xlu0.b32.end [16/16] 0.0, 128
        %v582 = vpop.trf.xlu0
        %v583 = vpop.trf.xlu0
        %v584 = vpop.trf.xlu0
        %v585 = vpop.trf.xlu0
        %v586 = vpop.trf.xlu0
        %v587 = vpop.trf.xlu0
        %v588 = vpop.trf.xlu0
        %v589 = vpop.trf.xlu0
        %v590 = vpop.trf.xlu0
        %v591 = vpop.trf.xlu0
        %v592 = vpop.trf.xlu0
        %v593 = vpop.trf.xlu0
        %v594 = vpop.trf.xlu0
        %v595 = vpop.trf.xlu0
        %v596 = vpop.trf.xlu0
        %v597 = vpop.trf.xlu0
        %v599 = vsel %vm389, %v582, 0
        %v602 = vsel %vm389, %v583, 0
        %v605 = vsel %vm389, %v584, 0
        %v608 = vsel %vm389, %v585, 0
        %610 = vmatprep.subr.mxu0 0.0
        %611 = vmatpush1.msra.mxu0 %v562
        %612 = vmatprep.subr.mxu0 0.0
        %613 = vmatpush1.msra.mxu0 0.0
        %614 = vmatprep.subr.mxu0 0.0
        %615 = vmatpush1.msra.mxu0 0.0
        %616 = vmatprep.subr.mxu0 0.0
        %617 = vmatpush1.msra.mxu0 0.0
        %618 = vmatprep.subr.mxu0 0.0
        %619 = vmatpush1.msra.mxu0 0.0
        %620 = vmatprep.subr.mxu0 0.0
        %621 = vmatpush1.msra.mxu0 0.0
        %622 = vmatprep.subr.mxu0 0.0
        %623 = vmatpush1.msra.mxu0 0.0
        %624 = vmatprep.subr.mxu0 0.0
        %625 = vmatpush1.msra.mxu0 0.0
        %626 = vmatprep.subr.mxu0 0.0
        %627 = vmatpush1.msra.mxu0 0.0
        %628 = vmatprep.subr.mxu0 0.0
        %629 = vmatpush1.msra.mxu0 0.0
        %630 = vmatprep.subr.mxu0 0.0
        %631 = vmatpush1.msra.mxu0 0.0
        %632 = vmatprep.subr.mxu0 0.0
        %633 = vmatpush1.msra.mxu0 0.0
        %634 = vmatprep.subr.mxu0 0.0
        %635 = vmatpush1.msra.mxu0 0.0
        %636 = vmatprep.subr.mxu0 0.0
        %637 = vmatpush1.msra.mxu0 0.0
        %638 = vmatprep.subr.mxu0 0.0
        %639 = vmatpush1.msra.mxu0 0.0
        %640 = vmatprep.subr.mxu0 0.0
        %641 = vmatpush1.msra.mxu0 0.0
        %642 = vmatprep.subr.mxu0 0.0
        %643 = vmatpush1.msra.mxu0 0.0
        %644 = vmatprep.subr.mxu0 0.0
        %645 = vmatpush1.msra.mxu0 0.0
        %646 = vmatprep.subr.mxu0 0.0
        %647 = vmatpush1.msra.mxu0 0.0
        %648 = vmatprep.subr.mxu0 0.0
        %649 = vmatpush1.msra.mxu0 0.0
        %650 = vmatprep.subr.mxu0 0.0
        %651 = vmatpush1.msra.mxu0 0.0
        %652 = vmatprep.subr.mxu0 0.0
        %653 = vmatpush1.msra.mxu0 0.0
        %654 = vmatprep.subr.mxu0 0.0
        %655 = vmatpush1.msra.mxu0 0.0
        %656 = vmatprep.subr.mxu0 0.0
        %657 = vmatpush1.msra.mxu0 0.0
        %658 = vmatprep.subr.mxu0 0.0
        %659 = vmatpush1.msra.mxu0 0.0
        %660 = vmatprep.subr.mxu0 0.0
        %661 = vmatpush1.msra.mxu0 0.0
        %662 = vmatprep.subr.mxu0 0.0
        %663 = vmatpush1.msra.mxu0 0.0
        %664 = vmatprep.subr.mxu0 0.0
        %665 = vmatpush1.msra.mxu0 0.0
        %666 = vmatprep.subr.mxu0 0.0
        %667 = vmatpush1.msra.mxu0 0.0
        %668 = vmatprep.subr.mxu0 0.0
        %669 = vmatpush1.msra.mxu0 0.0
        %670 = vmatprep.subr.mxu0 0.0
        %671 = vmatpush1.msra.mxu0 0.0
        %672 = vmatprep.subr.mxu0 0.0
        %673 = vmatpush1.msra.mxu0 0.0
        %674 = vmatprep.mubr.f32.mxu0 0.0
        %675 = vmatmul.mubr.f32.gmra.mrb[0].mxu0 %v599
        %v676 = vpop.f32.mrb[0].mxu0
        %v677 = vadd.f32 0.0, %v676
        %v678 = vpop.f32.mrb[0].mxu0
        %679 = vmatprep.mubr.f32.mxu0 0.0
        %680 = vmatmul.mubr.f32.gmra.mrb[0].mxu0 %v602
        %v681 = vpop.f32.mrb[0].mxu0
        %v682 = vadd.f32 0.0, %v681
        %v683 = vpop.f32.mrb[0].mxu0
        %684 = vmatprep.mubr.f32.mxu0 0.0
        %685 = vmatmul.mubr.f32.gmra.mrb[0].mxu0 %v605
        %v686 = vpop.f32.mrb[0].mxu0
        %v687 = vadd.f32 0.0, %v686
        %v688 = vpop.f32.mrb[0].mxu0
        %689 = vmatprep.mubr.f32.mxu0 0.0
        %690 = vmatmul.mubr.f32.gmra.mrb[0].mxu0 %v608
        %v691 = vpop.f32.mrb[0].mxu0
        %v692 = vadd.f32 0.0, %v691
        %v693 = vpop.f32.mrb[0].mxu0
        %694 = vdwg.mxu0
        %v695 = vld [vmem:[%s5] sm:$0xff]
        %v696 = vld [vmem:[%s5 + $0x8] sm:$0xff]
        %v697 = vld [vmem:[%s5 + $0x10] sm:$0xff]
        %v698 = vld [vmem:[%s5 + $0x18] sm:$0xff]
        %v700 = vsel %vm463, %v695, 0
        %v703 = vsel %vm463, %v696, 0
        %v706 = vsel %vm463, %v697, 0
        %v709 = vsel %vm463, %v698, 0
        %711 = vmatprep.subr.mxu0 0.0
        %712 = vmatpush1.msra.mxu0 %v677
        %713 = vmatprep.subr.mxu0 0.0
        %714 = vmatpush1.msra.mxu0 %v682
        %715 = vmatprep.subr.mxu0 0.0
        %716 = vmatpush1.msra.mxu0 %v687
        %717 = vmatprep.subr.mxu0 0.0
        %718 = vmatpush1.msra.mxu0 %v692
        %719 = vmatprep.subr.mxu0 0.0
        %720 = vmatpush1.msra.mxu0 0.0
        %721 = vmatprep.subr.mxu0 0.0
        %722 = vmatpush1.msra.mxu0 0.0
        %723 = vmatprep.subr.mxu0 0.0
        %724 = vmatpush1.msra.mxu0 0.0
        %725 = vmatprep.subr.mxu0 0.0
        %726 = vmatpush1.msra.mxu0 0.0
        %727 = vmatprep.subr.mxu0 0.0
        %728 = vmatpush1.msra.mxu0 0.0
        %729 = vmatprep.subr.mxu0 0.0
        %730 = vmatpush1.msra.mxu0 0.0
        %731 = vmatprep.subr.mxu0 0.0
        %732 = vmatpush1.msra.mxu0 0.0
        %733 = vmatprep.subr.mxu0 0.0
        %734 = vmatpush1.msra.mxu0 0.0
        %735 = vmatprep.subr.mxu0 0.0
        %736 = vmatpush1.msra.mxu0 0.0
        %737 = vmatprep.subr.mxu0 0.0
        %738 = vmatpush1.msra.mxu0 0.0
        %739 = vmatprep.subr.mxu0 0.0
        %740 = vmatpush1.msra.mxu0 0.0
        %741 = vmatprep.subr.mxu0 0.0
        %742 = vmatpush1.msra.mxu0 0.0
        %743 = vmatprep.subr.mxu0 0.0
        %744 = vmatpush1.msra.mxu0 0.0
        %745 = vmatprep.subr.mxu0 0.0
        %746 = vmatpush1.msra.mxu0 0.0
        %747 = vmatprep.subr.mxu0 0.0
        %748 = vmatpush1.msra.mxu0 0.0
        %749 = vmatprep.subr.mxu0 0.0
        %750 = vmatpush1.msra.mxu0 0.0
        %751 = vmatprep.subr.mxu0 0.0
        %752 = vmatpush1.msra.mxu0 0.0
        %753 = vmatprep.subr.mxu0 0.0
        %754 = vmatpush1.msra.mxu0 0.0
        %755 = vmatprep.subr.mxu0 0.0
        %756 = vmatpush1.msra.mxu0 0.0
        %757 = vmatprep.subr.mxu0 0.0
        %758 = vmatpush1.msra.mxu0 0.0
        %759 = vmatprep.subr.mxu0 0.0
        %760 = vmatpush1.msra.mxu0 0.0
        %761 = vmatprep.subr.mxu0 0.0
        %762 = vmatpush1.msra.mxu0 0.0
        %763 = vmatprep.subr.mxu0 0.0
        %764 = vmatpush1.msra.mxu0 0.0
        %765 = vmatprep.subr.mxu0 0.0
        %766 = vmatpush1.msra.mxu0 0.0
        %767 = vmatprep.subr.mxu0 0.0
        %768 = vmatpush1.msra.mxu0 0.0
        %769 = vmatprep.subr.mxu0 0.0
        %770 = vmatpush1.msra.mxu0 0.0
        %771 = vmatprep.subr.mxu0 0.0
        %772 = vmatpush1.msra.mxu0 0.0
        %773 = vmatprep.subr.mxu0 0.0
        %774 = vmatpush1.msra.mxu0 0.0
        %775 = vmatprep.mubr.f32.mxu0 0.0
        %776 = vmatmul.mubr.f32.gmra.mrb[0].mxu0 %v700
        %v777 = vpop.f32.mrb[0].mxu0
        %v778 = vadd.f32 0.0, %v777
        %v779 = vpop.f32.mrb[0].mxu0
        %780 = vmatprep.mubr.f32.mxu0 0.0
        %781 = vmatmul.mubr.f32.gmra.mrb[0].mxu0 %v703
        %v782 = vpop.f32.mrb[0].mxu0
        %v783 = vadd.f32 0.0, %v782
        %v784 = vpop.f32.mrb[0].mxu0
        %785 = vmatprep.mubr.f32.mxu0 0.0
        %786 = vmatmul.mubr.f32.gmra.mrb[0].mxu0 %v706
        %v787 = vpop.f32.mrb[0].mxu0
        %v788 = vadd.f32 0.0, %v787
        %v789 = vpop.f32.mrb[0].mxu0
        %790 = vmatprep.mubr.f32.mxu0 0.0
        %791 = vmatmul.mubr.f32.gmra.mrb[0].mxu0 %v709
        %v792 = vpop.f32.mrb[0].mxu0
        %v793 = vadd.f32 0.0, %v792
        %v794 = vpop.f32.mrb[0].mxu0
        %795 = vdwg.mxu0
        %796 = vst.msk [vmem:[%s278] sm:$0xff] %vm543, %v778
        %797 = vst.msk [vmem:[%s278 + $0x8] sm:$0xff] %vm543, %v783
        %798 = vst.msk [vmem:[%s278 + $0x10] sm:$0xff] %vm543, %v788
        %799 = vst.msk [vmem:[%s278 + $0x18] sm:$0xff] %vm543, %v793
        %p800 = scmp.lt.s32.totalorder %s27, 1
        %s801 = scalar_select %p800, %s27, 1
        %s802 = smul.addr %s801, 4
        %s803 = smul.addr %s802, 8
        %s804 = scalar_lea.vmem %s6, %s803
        // Predicated region
        $region49: #{tpu_custom_call.1} parent=39 // pred_check
          %p805 = pneg %p160
        $region50: #{tpu_custom_call.1} parent=39 // pred_check_branch
          %807 = sbr.rel (%p805) target = $region52
        $region51: #{tpu_custom_call.1} parent=39 // pred_region
          _
        $region52: #{tpu_custom_call.1} parent=39 // pred_fallthru
          _
      $region40: #{tpu_custom_call.1} parent=5 // pred_fallthru
        _
      %p808 = scmp.le.s32.totalorder 2, %s22
      // Predicated region
      $region53: #{tpu_custom_call.1} parent=5 // pred_check
        %p809 = pneg %p808
      $region54: #{tpu_custom_call.1} parent=5 // pred_check_branch
        %811 = sbr.rel (%p809) target = $region56
      $region55: #{tpu_custom_call.1} parent=5 // pred_region
        %s812 = ssub.s32 %s22, 2
        // Predicated region
        $region57: #{tpu_custom_call.1} parent=55 // pred_check
          %p813 = pneg %p166
        $region58: #{tpu_custom_call.1} parent=55 // pred_check_branch
          %815 = sbr.rel (%p813) target = $region60
        $region59: #{tpu_custom_call.1} parent=55 // pred_region
          %p816 = scmp.lt.s32.totalorder %s28, 1
          %s817 = scalar_select %p816, %s28, 1
          %s818 = smul.addr %s817, 4
          %s819 = smul.addr %s818, 8
          %s820 = scalar_lea.vmem %s6, %s819
        $region60: #{tpu_custom_call.1} parent=55 // pred_fallthru
          _
      $region56: #{tpu_custom_call.1} parent=5 // pred_fallthru
        _
    $region6: #{tpu_custom_call.1} parent=1 // loop_footer
      %s26 = sadd.s32 1, %s22
    $region7: #{tpu_custom_call.1} parent=1 // loop_footer_branch
      %21 = sbr.rel target = $region3
    $region8: #{tpu_custom_call.1} parent=1 // loop_exit
      _
    %821 = vsyncpa [#allocation5], 1
    %s822 = scalar_lea.sflag [#allocation5], 1
    %823 = vsyncpa %s822, 1
    %824 = vsyncpa [#allocation7], 1

</llo_original>
